<compile_context>
chip_gen: v6e
topology: v6e:2x2x1
jax: 0.10.0
libtpu: 0.0.40
codegen_flags: <defaults>
</compile_context>

<pallas_src>
import jax
import jax.numpy as jnp
from jax.experimental import pallas as pl
from jax.experimental.pallas import tpu as pltpu


_LANE = 128      # pad the output feature dim to a multiple of this (lane-dense stores)
_SUBLANE = 8     # pad the batch dim to a multiple of this
_TILE_B = 1024   # batch rows per grid step when tiling (512-2048 sweet spot;
                 # 1024 x 128 x 4B x double-buffer stays far below v7x's 64 MiB VMEM)


def _round_up(x, m):
    return ((x + m - 1) // m) * m


def qnet_kernel(z_ref, w1_ref, b1_ref, w2_ref, b2_ref, o_ref):
    """Fused 2-layer MLP on one batch tile: (z @ W1 + b1) -> ReLU -> (@ W2 + b2).

    Everything lives in VMEM; both matmuls run back-to-back on the MXU with f32
    accumulation, bias + ReLU on the VPU. No K/N tiling: the contraction dims
    are below one MXU tile, so splitting them would only add serial grid steps.
    """
    z = z_ref[...]                                                   # (TB, 2*n_classes)
    h = jnp.dot(z, w1_ref[...], preferred_element_type=jnp.float32)  # f32 accumulate
    h = jnp.maximum(h + b1_ref[...], 0.0)                            # bias + ReLU (f32)
    # Only the MXU operand is cast to the weight dtype (no-op for f32 weights,
    # intended bf16 operand cast if bf16 weights are adopted); accumulation stays f32.
    o = jnp.dot(h.astype(w2_ref.dtype), w2_ref[...],
                preferred_element_type=jnp.float32)
    o = o + b2_ref[...]
    o_ref[...] = o.astype(o_ref.dtype)                               # lane-dense (TB, n_pad)


def qnet_forward(zcat, w1, b1, w2, b2, *, tile_b=_TILE_B):
    """zcat: (B, 2*n_classes); w1: (2*n_classes, n_units); b1: (n_units,) or (1, n_units);
    w2: (n_units, n_classes); b2: (n_classes,) or (1, n_classes)."""
    B, f_in = zcat.shape
    n_units = w1.shape[1]
    n_classes = w2.shape[1]
    out_dtype = zcat.dtype

    # Lane-dense output: zero-pad the output feature dim up to a multiple of 128
    # so the kernel's stores are full-width vst instead of masked partial stores.
    n_pad = _round_up(n_classes, _LANE)
    if n_pad != n_classes:
        w2p = jnp.pad(w2, ((0, 0), (0, n_pad - n_classes)))
        b2p = jnp.pad(b2.reshape(1, n_classes), ((0, 0), (0, n_pad - n_classes)))
    else:
        w2p = w2
        b2p = b2.reshape(1, n_classes)
    b1r = b1.reshape(1, n_units)

    if B <= tile_b:
        # Small batch: one full-array block resident in VMEM, no grid at all
        # (avoids ~0.35 us/step grid-loop + pipeline machinery for a <10 KiB problem).
        bp = _round_up(max(B, 1), _SUBLANE)
        zp = jnp.pad(zcat, ((0, bp - B), (0, 0))) if bp != B else zcat
        out = pl.pallas_call(
            qnet_kernel,
            out_shape=jax.ShapeDtypeStruct((bp, n_pad), out_dtype),
        )(zp, w1, b1r, w2p, b2p)
    else:
        # Large batch: tile over B (activation-bandwidth bound). Weights/biases use a
        # constant index_map so they are fetched once and stay VMEM-resident; the batch
        # axis is "parallel" so v7x's two TensorCores can split it (no-op on v5e/v6e).
        bp = _round_up(B, tile_b)
        zp = jnp.pad(zcat, ((0, bp - B), (0, 0))) if bp != B else zcat
        out = pl.pallas_call(
            qnet_kernel,
            out_shape=jax.ShapeDtypeStruct((bp, n_pad), out_dtype),
            grid=(bp // tile_b,),
            in_specs=[
                pl.BlockSpec((tile_b, f_in), lambda i: (i, 0)),
                pl.BlockSpec((f_in, n_units), lambda i: (0, 0)),
                pl.BlockSpec((1, n_units), lambda i: (0, 0)),
                pl.BlockSpec((n_units, n_pad), lambda i: (0, 0)),
                pl.BlockSpec((1, n_pad), lambda i: (0, 0)),
            ],
            out_specs=pl.BlockSpec((tile_b, n_pad), lambda i: (i, 0)),
            compiler_params=pltpu.CompilerParams(
                dimension_semantics=("parallel",)),
        )(zp, w1, b1r, w2p, b2p)

    return out[:B, :n_classes]


def init_qnet_params(key, n_units, n_classes, std=0.01, dtype=jnp.float32):
    # Mirrors QNet.init_weights: Linear weights ~ N(0, std), biases zero.
    # PyTorch Linear weight is (out, in); we store the transpose (in, out).
    k1, k2 = jax.random.split(key)
    w1 = (std * jax.random.normal(k1, (2 * n_classes, n_units))).astype(dtype)
    b1 = jnp.zeros((1, n_units), dtype=dtype)
    w2 = (std * jax.random.normal(k2, (n_units, n_classes))).astype(dtype)
    b2 = jnp.zeros((1, n_classes), dtype=dtype)
    return w1, b1, w2, b2


def _reference(zcat, w1, b1, w2, b2):
    return jnp.maximum(zcat @ w1 + b1.reshape(1, -1), 0.0) @ w2 + b2.reshape(1, -1)


if __name__ == "__main__":
    key = jax.random.PRNGKey(0)
    k_small, k_large, k_p = jax.random.split(key, 3)

    n_classes = 16
    n_units = 32
    w1, b1, w2, b2 = init_qnet_params(k_p, n_units, n_classes)

    # Small batch -> no-grid, fully VMEM-resident path.
    batch = 8
    zcat = jax.random.normal(k_small, (batch, 2 * n_classes), dtype=jnp.float32)
    out = jax.block_until_ready(qnet_forward(zcat, w1, b1, w2, b2))
    ref = _reference(zcat, w1, b1, w2, b2)
    assert out.shape == (batch, n_classes)
    assert jnp.allclose(out, ref, atol=1e-5, rtol=1e-5)

    # Larger (ragged) batch -> tiled "parallel" path with batch padding.
    batch_l = 2560
    zcat_l = jax.random.normal(k_large, (batch_l, 2 * n_classes), dtype=jnp.float32)
    out_l = jax.block_until_ready(qnet_forward(zcat_l, w1, b1, w2, b2))
    ref_l = _reference(zcat_l, w1, b1, w2, b2)
    assert out_l.shape == (batch_l, n_classes)
    assert jnp.allclose(out_l, ref_l, atol=1e-5, rtol=1e-5)

    print("KERNEL_OK")
</pallas_src>

<mosaic_0001>
module attributes {stable_mosaic.version = 11 : i64} {
  func.func @qnet_kernel(%arg0: memref<8x32xf32, #tpu.memory_space<vmem>>, %arg1: memref<32x32xf32, #tpu.memory_space<vmem>>, %arg2: memref<1x32xf32, #tpu.memory_space<vmem>>, %arg3: memref<32x128xf32, #tpu.memory_space<vmem>>, %arg4: memref<1x128xf32, #tpu.memory_space<vmem>>, %arg5: memref<8x128xf32, #tpu.memory_space<vmem>>) attributes {dimension_semantics = [], scalar_prefetch = 0 : i64, scratch_operands = 0 : i64, tpu.core_type = #tpu.core_type<tc>} {
    %c0 = arith.constant 0 : index
    %c0_0 = arith.constant 0 : index
    %0 = vector.load %arg0[%c0, %c0_0] : memref<8x32xf32, #tpu.memory_space<vmem>>, vector<8x32xf32>
    %c0_1 = arith.constant 0 : index
    %c0_2 = arith.constant 0 : index
    %1 = vector.load %arg1[%c0_1, %c0_2] : memref<32x32xf32, #tpu.memory_space<vmem>>, vector<32x32xf32>
    %cst = arith.constant dense<0.000000e+00> : vector<8x32xf32>
    %2 = tpu.matmul %0, %1, %cst {dimension_numbers = #tpu.dot_dimension_numbers<[1], [0], [0], [1], [0, 0, 1, 1], [], []>} : vector<8x32xf32>, vector<32x32xf32>, vector<8x32xf32> -> vector<8x32xf32>
    %c0_3 = arith.constant 0 : index
    %c0_4 = arith.constant 0 : index
    %3 = vector.load %arg2[%c0_3, %c0_4] : memref<1x32xf32, #tpu.memory_space<vmem>>, vector<1x32xf32>
    %4 = vector.broadcast %3 : vector<1x32xf32> to vector<8x32xf32>
    %5 = arith.addf %2, %4 : vector<8x32xf32>
    %cst_5 = arith.constant 0.000000e+00 : f32
    %6 = vector.broadcast %cst_5 : f32 to vector<8x32xf32>
    %7 = arith.maximumf %5, %6 : vector<8x32xf32>
    %c0_6 = arith.constant 0 : index
    %c0_7 = arith.constant 0 : index
    %8 = vector.load %arg3[%c0_6, %c0_7] : memref<32x128xf32, #tpu.memory_space<vmem>>, vector<32x128xf32>
    %cst_8 = arith.constant dense<0.000000e+00> : vector<8x128xf32>
    %9 = tpu.matmul %7, %8, %cst_8 {dimension_numbers = #tpu.dot_dimension_numbers<[1], [0], [0], [1], [0, 0, 1, 1], [], []>} : vector<8x32xf32>, vector<32x128xf32>, vector<8x128xf32> -> vector<8x128xf32>
    %c0_9 = arith.constant 0 : index
    %c0_10 = arith.constant 0 : index
    %10 = vector.load %arg4[%c0_9, %c0_10] : memref<1x128xf32, #tpu.memory_space<vmem>>, vector<1x128xf32>
    %11 = vector.broadcast %10 : vector<1x128xf32> to vector<8x128xf32>
    %12 = arith.addf %9, %11 : vector<8x128xf32>
    %c0_11 = arith.constant 0 : index
    %c0_12 = arith.constant 0 : index
    %13 = vector.load %arg5[%c0_11, %c0_12] : memref<8x128xf32, #tpu.memory_space<vmem>>, vector<8x128xf32>
    tpu.vector_store %arg5[%c0_11, %c0_12], %12 {strides = array<i32>} : memref<8x128xf32, #tpu.memory_space<vmem>>, vector<8x128xf32>,
    return
  }
}

</mosaic_0001>

<llo_original>
// kernel: tpu_custom_call.1
$region0: #{tpu_custom_call.1}
  #allocation0 [shape = 'u32[]', space=smem, size = 0x4, offset = 0x4, fixed_abs, tag = 'smem constant byte address 0x4 - core index']
  #allocation1 [shape = 'u32[144,128]{1,0:T(1,128)}', space=vmem, size = 0x12000, scoped, tag = 'internal scratch']
  %s0 = inlined_call_operand.hbm [shape: f32[8,32], index: 0, kind: input, shape index: {}]
  %s1 = inlined_call_operand.hbm [shape: f32[32,32], index: 1, kind: input, shape index: {}]
  %s2 = inlined_call_operand.vmem [shape: f32[1,32], index: 2, kind: input, shape index: {}]
  %s3 = inlined_call_operand.hbm [shape: f32[32,128], index: 3, kind: input, shape index: {}]
  %s4 = inlined_call_operand.vmem [shape: f32[1,128], index: 4, kind: input, shape index: {}]
  %s5 = inlined_call_operand.hbm [shape: f32[8,128], index: 5, kind: output, shape index: {}]
  %s6 = sld [smem:[#allocation0]]
  $region42: #{tpu_custom_call.1} parent=0
    _
  %s8 = ssub.s32 1, %s6
  %s9 = scalar_select 0, %s8, %s6
  $region1: #{tpu_custom_call.1} parent=0
    #allocation2 [shape = 'u8[4096]{0}', space=vmem, size = 0x1000, scoped, tag = 'input window, operand 0, single buffered']
    #allocation3 [shape = 's32[1]{0}', space=sflag, size = 0x4, scoped, tag = 'scoped memory for tpu_custom_call.1']
    #allocation4 [shape = 's32[1]{0}', space=sflag, size = 0x4, scoped, tag = 'scoped memory for tpu_custom_call.1']
    #allocation5 [shape = 'u8[16384]{0}', space=vmem, size = 0x4000, scoped, tag = 'input window, operand 1, single buffered']
    #allocation6 [shape = 's32[1]{0}', space=sflag, size = 0x4, scoped, tag = 'scoped memory for tpu_custom_call.1']
    #allocation7 [shape = 'u8[16384]{0}', space=vmem, size = 0x4000, scoped, tag = 'input window, operand 3, single buffered']
    #allocation8 [shape = 'u8[4096]{0}', space=vmem, size = 0x1000, scoped, tag = 'output window, operand 0, single buffered']
    %10 = vsyncpa [#allocation3], 0
    %11 = vsyncpa [#allocation6], 0
    %12 = vsyncpa [#allocation4], 0
    // Predicated region
    $region2: #{tpu_custom_call.1} parent=1 // pred_check
      _
    $region3: #{tpu_custom_call.1} parent=1 // pred_check_branch
      %14 = sbr.rel (0) target = $region5
    $region4: #{tpu_custom_call.1} parent=1 // pred_region
      %s16 = ssub.s32 128, 128
      %17 = vsyncadd [#allocation3], %s16
      %s19 = sshll.u32 [#allocation2], 4
      %s20 = int_to_ptr.vmem [resolvable:$true] %s19
      %22 = dma.hbm_to_vmem [thread:$0]  %s0, 128, %s20, [#allocation3]
    $region5: #{tpu_custom_call.1} parent=1 // pred_fallthru
      _
    // Predicated region
    $region6: #{tpu_custom_call.1} parent=1 // pred_check
      _
    $region7: #{tpu_custom_call.1} parent=1 // pred_check_branch
      %24 = sbr.rel (0) target = $region9
    $region8: #{tpu_custom_call.1} parent=1 // pred_region
      %s26 = ssub.s32 512, 512
      %27 = vsyncadd [#allocation6], %s26
      %s28 = sshll.u32 [#allocation5], 4
      %s29 = int_to_ptr.vmem [resolvable:$true] %s28
      %34 = dma.hbm_to_vmem [thread:$0]  %s1, 512, %s29, [#allocation6], 128, 128, 8
    $region9: #{tpu_custom_call.1} parent=1 // pred_fallthru
      _
    // Predicated region
    $region10: #{tpu_custom_call.1} parent=1 // pred_check
      _
    $region11: #{tpu_custom_call.1} parent=1 // pred_check_branch
      %36 = sbr.rel (0) target = $region13
    $region12: #{tpu_custom_call.1} parent=1 // pred_region
      _
    $region13: #{tpu_custom_call.1} parent=1 // pred_fallthru
      _
    // Predicated region
    $region14: #{tpu_custom_call.1} parent=1 // pred_check
      _
    $region15: #{tpu_custom_call.1} parent=1 // pred_check_branch
      %38 = sbr.rel (0) target = $region17
    $region16: #{tpu_custom_call.1} parent=1 // pred_region
      %s40 = ssub.s32 512, 512
      %41 = vsyncadd [#allocation6], %s40
      %s42 = sshll.u32 [#allocation7], 4
      %s43 = int_to_ptr.vmem [resolvable:$true] %s42
      %48 = dma.hbm_to_vmem [thread:$0]  %s3, 512, %s43, [#allocation6], 128, 128, 8
    $region17: #{tpu_custom_call.1} parent=1 // pred_fallthru
      _
    // Predicated region
    $region18: #{tpu_custom_call.1} parent=1 // pred_check
      _
    $region19: #{tpu_custom_call.1} parent=1 // pred_check_branch
      %50 = sbr.rel (0) target = $region21
    $region20: #{tpu_custom_call.1} parent=1 // pred_region
      _
    $region21: #{tpu_custom_call.1} parent=1 // pred_fallthru
      _
    // Predicated region
    $region22: #{tpu_custom_call.1} parent=1 // pred_check
      _
    $region23: #{tpu_custom_call.1} parent=1 // pred_check_branch
      %52 = sbr.rel (0) target = $region25
    $region24: #{tpu_custom_call.1} parent=1 // pred_region
      %53 = dma.done [#allocation3], 128
    $region25: #{tpu_custom_call.1} parent=1 // pred_fallthru
      _
    // Predicated region
    $region26: #{tpu_custom_call.1} parent=1 // pred_check
      _
    $region27: #{tpu_custom_call.1} parent=1 // pred_check_branch
      %55 = sbr.rel (0) target = $region29
    $region28: #{tpu_custom_call.1} parent=1 // pred_region
      %56 = dma.done [#allocation6], 512
    $region29: #{tpu_custom_call.1} parent=1 // pred_fallthru
      _
    // Predicated region
    $region30: #{tpu_custom_call.1} parent=1 // pred_check
      _
    $region31: #{tpu_custom_call.1} parent=1 // pred_check_branch
      %58 = sbr.rel (0) target = $region33
    $region32: #{tpu_custom_call.1} parent=1 // pred_region
      %59 = dma.done [#allocation6], 512
    $region33: #{tpu_custom_call.1} parent=1 // pred_fallthru
      _
    %v60 = vld [vmem:[#allocation2] sm:$0xff]
    %v61 = vld [vmem:[#allocation5] sm:$0xff]
    %v62 = vld [vmem:[#allocation5 + $0x8] sm:$0xff]
    %v63 = vld [vmem:[#allocation5 + $0x10] sm:$0xff]
    %v64 = vld [vmem:[#allocation5 + $0x18] sm:$0xff]
    %v65 = vld [vmem:[%s2] sm:$0x1]
    %v67 = vlaneseq
    %v68 = vshrl.u32 %v67, 7
    %v69 = vsub.s32 0, %v68
    %v70 = vrot.slane %v65, %v69
    %vm72 = vcmask 261120
    %v74 = vsel %vm72, %v60, 0
    %76 = vmatprep.subr.mxu0 0.0
    %77 = vmatpush1.msra.mxu0 0.0
    %78 = vmatprep.subr.mxu0 0.0
    %79 = vmatpush1.msra.mxu0 0.0
    %80 = vmatprep.subr.mxu0 0.0
    %81 = vmatpush1.msra.mxu0 0.0
    %82 = vmatprep.subr.mxu0 0.0
    %83 = vmatpush1.msra.mxu0 0.0
    %84 = vmatprep.subr.mxu0 0.0
    %85 = vmatpush1.msra.mxu0 0.0
    %86 = vmatprep.subr.mxu0 0.0
    %87 = vmatpush1.msra.mxu0 0.0
    %88 = vmatprep.subr.mxu0 0.0
    %89 = vmatpush1.msra.mxu0 0.0
    %90 = vmatprep.subr.mxu0 0.0
    %91 = vmatpush1.msra.mxu0 0.0
    %92 = vmatprep.subr.mxu0 0.0
    %93 = vmatpush1.msra.mxu0 0.0
    %94 = vmatprep.subr.mxu0 0.0
    %95 = vmatpush1.msra.mxu0 0.0
    %96 = vmatprep.subr.mxu0 0.0
    %97 = vmatpush1.msra.mxu0 0.0
    %98 = vmatprep.subr.mxu0 0.0
    %99 = vmatpush1.msra.mxu0 0.0
    %100 = vmatprep.subr.mxu0 0.0
    %101 = vmatpush1.msra.mxu0 %v64
    %102 = vmatprep.subr.mxu0 0.0
    %103 = vmatpush1.msra.mxu0 %v63
    %104 = vmatprep.subr.mxu0 0.0
    %105 = vmatpush1.msra.mxu0 %v62
    %106 = vmatprep.subr.mxu0 0.0
    %107 = vmatpush1.msra.mxu0 %v61
    %108 = vmatprep.subr.mxu0 0.0
    %109 = vmatpush2.msra.mxu0 0.0
    %110 = vmatprep.subr.mxu0 0.0
    %111 = vmatpush2.msra.mxu0 0.0
    %112 = vmatprep.subr.mxu0 0.0
    %113 = vmatpush2.msra.mxu0 0.0
    %114 = vmatprep.subr.mxu0 0.0
    %115 = vmatpush2.msra.mxu0 0.0
    %116 = vmatprep.subr.mxu0 0.0
    %117 = vmatpush2.msra.mxu0 0.0
    %118 = vmatprep.subr.mxu0 0.0
    %119 = vmatpush2.msra.mxu0 0.0
    %120 = vmatprep.subr.mxu0 0.0
    %121 = vmatpush2.msra.mxu0 0.0
    %122 = vmatprep.subr.mxu0 0.0
    %123 = vmatpush2.msra.mxu0 0.0
    %124 = vmatprep.subr.mxu0 0.0
    %125 = vmatpush2.msra.mxu0 0.0
    %126 = vmatprep.subr.mxu0 0.0
    %127 = vmatpush2.msra.mxu0 0.0
    %128 = vmatprep.subr.mxu0 0.0
    %129 = vmatpush2.msra.mxu0 0.0
    %130 = vmatprep.subr.mxu0 0.0
    %131 = vmatpush2.msra.mxu0 0.0
    %132 = vmatprep.subr.mxu0 0.0
    %133 = vmatpush2.msra.mxu0 0.0
    %134 = vmatprep.subr.mxu0 0.0
    %135 = vmatpush2.msra.mxu0 0.0
    %136 = vmatprep.subr.mxu0 0.0
    %137 = vmatpush2.msra.mxu0 0.0
    %138 = vmatprep.subr.mxu0 0.0
    %139 = vmatpush2.msra.mxu0 0.0
    %140 = vmatprep.mubr.f32.mxu0 0.0
    %141 = vmatmul.mubr.f32.gmra.mxu0 %v74
    %v142 = vpop.f32.mrf.mxu0
    %v143 = vadd.f32 %v70, %v142
    %v144 = vpop.f32.mrf.mxu0
    %145 = vdwg.mxu0
    %v146 = vmax.f32 %v143, 0.0
    %v147 = vld [vmem:[#allocation7] sm:$0xff]
    %v148 = vld [vmem:[#allocation7 + $0x8] sm:$0xff]
    %v149 = vld [vmem:[#allocation7 + $0x10] sm:$0xff]
    %v150 = vld [vmem:[#allocation7 + $0x18] sm:$0xff]
    %v151 = vld [vmem:[%s4] sm:$0x1]
    %v153 = vlaneseq
    %v154 = vshrl.u32 %v153, 7
    %v155 = vsub.s32 0, %v154
    %v156 = vrot.slane %v151, %v155
    %v159 = vsel %vm72, %v146, 0
    %161 = vmatprep.subr.mxu0 0.0
    %162 = vmatpush1.msra.mxu0 0.0
    %163 = vmatprep.subr.mxu0 0.0
    %164 = vmatpush1.msra.mxu0 0.0
    %165 = vmatprep.subr.mxu0 0.0
    %166 = vmatpush1.msra.mxu0 0.0
    %167 = vmatprep.subr.mxu0 0.0
    %168 = vmatpush1.msra.mxu0 0.0
    %169 = vmatprep.subr.mxu0 0.0
    %170 = vmatpush1.msra.mxu0 0.0
    %171 = vmatprep.subr.mxu0 0.0
    %172 = vmatpush1.msra.mxu0 0.0
    %173 = vmatprep.subr.mxu0 0.0
    %174 = vmatpush1.msra.mxu0 0.0
    %175 = vmatprep.subr.mxu0 0.0
    %176 = vmatpush1.msra.mxu0 0.0
    %177 = vmatprep.subr.mxu0 0.0
    %178 = vmatpush1.msra.mxu0 0.0
    %179 = vmatprep.subr.mxu0 0.0
    %180 = vmatpush1.msra.mxu0 0.0
    %181 = vmatprep.subr.mxu0 0.0
    %182 = vmatpush1.msra.mxu0 0.0
    %183 = vmatprep.subr.mxu0 0.0
    %184 = vmatpush1.msra.mxu0 0.0
    %185 = vmatprep.subr.mxu0 0.0
    %186 = vmatpush1.msra.mxu0 %v150
    %187 = vmatprep.subr.mxu0 0.0
    %188 = vmatpush1.msra.mxu0 %v149
    %189 = vmatprep.subr.mxu0 0.0
    %190 = vmatpush1.msra.mxu0 %v148
    %191 = vmatprep.subr.mxu0 0.0
    %192 = vmatpush1.msra.mxu0 %v147
    %193 = vmatprep.subr.mxu0 0.0
    %194 = vmatpush2.msra.mxu0 0.0
    %195 = vmatprep.subr.mxu0 0.0
    %196 = vmatpush2.msra.mxu0 0.0
    %197 = vmatprep.subr.mxu0 0.0
    %198 = vmatpush2.msra.mxu0 0.0
    %199 = vmatprep.subr.mxu0 0.0
    %200 = vmatpush2.msra.mxu0 0.0
    %201 = vmatprep.subr.mxu0 0.0
    %202 = vmatpush2.msra.mxu0 0.0
    %203 = vmatprep.subr.mxu0 0.0
    %204 = vmatpush2.msra.mxu0 0.0
    %205 = vmatprep.subr.mxu0 0.0
    %206 = vmatpush2.msra.mxu0 0.0
    %207 = vmatprep.subr.mxu0 0.0
    %208 = vmatpush2.msra.mxu0 0.0
    %209 = vmatprep.subr.mxu0 0.0
    %210 = vmatpush2.msra.mxu0 0.0
    %211 = vmatprep.subr.mxu0 0.0
    %212 = vmatpush2.msra.mxu0 0.0
    %213 = vmatprep.subr.mxu0 0.0
    %214 = vmatpush2.msra.mxu0 0.0
    %215 = vmatprep.subr.mxu0 0.0
    %216 = vmatpush2.msra.mxu0 0.0
    %217 = vmatprep.subr.mxu0 0.0
    %218 = vmatpush2.msra.mxu0 0.0
    %219 = vmatprep.subr.mxu0 0.0
    %220 = vmatpush2.msra.mxu0 0.0
    %221 = vmatprep.subr.mxu0 0.0
    %222 = vmatpush2.msra.mxu0 0.0
    %223 = vmatprep.subr.mxu0 0.0
    %224 = vmatpush2.msra.mxu0 0.0
    %225 = vmatprep.mubr.f32.mxu0 0.0
    %226 = vmatmul.mubr.f32.gmra.mxu0 %v159
    %v227 = vpop.f32.mrf.mxu0
    %v228 = vadd.f32 %v156, %v227
    %v229 = vpop.f32.mrf.mxu0
    %230 = vdwg.mxu0
    %231 = vst [vmem:[#allocation8] sm:$0xff] %v228
    // Predicated region
    $region34: #{tpu_custom_call.1} parent=1 // pred_check
      _
    $region35: #{tpu_custom_call.1} parent=1 // pred_check_branch
      %233 = sbr.rel (0) target = $region37
    $region36: #{tpu_custom_call.1} parent=1 // pred_region
      %s235 = ssub.s32 128, 128
      %236 = vsyncadd [#allocation4], %s235
      %s238 = sshll.u32 [#allocation8], 4
      %s239 = int_to_ptr.vmem [resolvable:$true] %s238
      %241 = dma.vmem_to_hbm [thread:$0]  %s239, 128, %s5, [#allocation4]
    $region37: #{tpu_custom_call.1} parent=1 // pred_fallthru
      _
    // Predicated region
    $region38: #{tpu_custom_call.1} parent=1 // pred_check
      _
    $region39: #{tpu_custom_call.1} parent=1 // pred_check_branch
      %243 = sbr.rel (0) target = $region41
    $region40: #{tpu_custom_call.1} parent=1 // pred_region
      %244 = dma.done [#allocation4], 128
    $region41: #{tpu_custom_call.1} parent=1 // pred_fallthru
      _
    %245 = vsyncpa [#allocation3], 1
    %246 = vsyncpa [#allocation6], 1
    %247 = vsyncpa [#allocation4], 1

</llo_original>
